<compile_context>
chip_gen: v7x
topology: tpu7x:2x2x1
jax: 0.10.0
libtpu: 0.0.40
codegen_flags: <defaults>
</compile_context>

<pallas_src>
import math

import jax
import jax.numpy as jnp
import numpy as np
from jax.experimental import pallas as pl
from jax.experimental.pallas import tpu as pltpu


def encoder_layer_kernel(x_ref, t_ref, wxp_ref, bxp_ref, wenc_t_ref, benc_ref,
                         out_ref, attn_ref):
    # x_ref      : (B, L, D)    t_ref    : (B, Lt, D)
    # wxp_ref    : (L, 1)       bxp_ref  : (1, 1)
    # wenc_t_ref : (D, D)  (pre-transposed: y = new_x @ wenc_t)
    # benc_ref   : (1, D)
    x = x_ref[...]                                   # (B, L, D)
    t = t_ref[...]                                   # (B, Lt, D)
    L = x.shape[1]
    d_model = x.shape[-1]

    # ---- attention stand-in: scaled-dot cross attention, mean-pooled ----
    # Batched over B in a single step; contraction over the last dims avoids
    # materializing any transpose.
    scores = jnp.einsum("bld,bkd->blk", x, t,
                        preferred_element_type=jnp.float32)        # (B, L, Lt)
    scores = scores * (1.0 / math.sqrt(d_model))
    scores = scores - jnp.max(scores, axis=-1, keepdims=True)
    e = jnp.exp(scores)
    inv_denom = pl.reciprocal(jnp.sum(e, axis=-1, keepdims=True))  # EUP path
    attn = e * inv_denom                                           # (B, L, Lt)
    ctx = jnp.einsum("blk,bkd->bld", attn, t,
                     preferred_element_type=jnp.float32)           # (B, L, D)
    att_pool = jnp.sum(ctx, axis=1) * (1.0 / L)                    # (B, D)

    # ---- x_proj: ReLU(Linear(seq_len, 1)(x.mT)).squeeze(-1) ----
    # xp[b, d] = sum_l w[l] * x[b, l, d] + b   (weight supplied as (L, 1))
    xp = jnp.sum(x * wxp_ref[...], axis=1) + bxp_ref[...]          # (B, D)
    xp = jnp.maximum(xp, 0.0)

    new_x = xp + att_pool                                          # (B, D)

    # ---- enc_layer: ReLU(Linear(d_model, d_model)(new_x)) ----
    # One (B, D) x (D, D) MXU matmul for the whole batch.
    y = jnp.dot(new_x, wenc_t_ref[...],
                preferred_element_type=jnp.float32) + benc_ref[...]
    y = jnp.maximum(y, 0.0)

    out_ref[...] = (new_x + y).astype(out_ref.dtype)
    attn_ref[...] = attn.astype(attn_ref.dtype)


def encoder_layer(x, target, w_xp, b_xp, w_enc, b_enc):
    B, L, D = x.shape
    Lt = target.shape[1]

    # Grid-invariant weight prep hoisted out of the kernel (runs once in XLA):
    #  - w_xp (1, L) -> (L, 1) column so it broadcasts over d inside the kernel
    #  - w_enc (D, D) pre-transposed so enc_layer is a plain new_x @ w_enc_t
    w_xp_col = jnp.transpose(w_xp).astype(jnp.float32)
    w_enc_t = jnp.transpose(w_enc).astype(jnp.float32)

    grid_spec = pltpu.PrefetchScalarGridSpec(
        num_scalar_prefetch=0,
        grid=(1,),  # single step: whole batch processed at once
        in_specs=[
            pl.BlockSpec((B, L, D), lambda i: (0, 0, 0)),   # x
            pl.BlockSpec((B, Lt, D), lambda i: (0, 0, 0)),  # target
            pl.BlockSpec((L, 1), lambda i: (0, 0)),         # x_proj weight (col)
            pl.BlockSpec((1, 1), lambda i: (0, 0)),         # x_proj bias
            pl.BlockSpec((D, D), lambda i: (0, 0)),         # enc weight (pre-T)
            pl.BlockSpec((1, D), lambda i: (0, 0)),         # enc bias
        ],
        out_specs=[
            pl.BlockSpec((B, D), lambda i: (0, 0)),         # new_x + y
            pl.BlockSpec((B, L, Lt), lambda i: (0, 0, 0)),  # attention weights
        ],
    )
    return pl.pallas_call(
        encoder_layer_kernel,
        out_shape=(jax.ShapeDtypeStruct((B, D), x.dtype),
                   jax.ShapeDtypeStruct((B, L, Lt), jnp.float32)),
        grid_spec=grid_spec,
        compiler_params=pltpu.CompilerParams(
            dimension_semantics=("arbitrary",)),
    )(x, target, w_xp_col, b_xp, w_enc_t, b_enc)


def encoder_layer_ref(x, target, w_xp, b_xp, w_enc, b_enc):
    """Pure-JAX reference mirroring the PyTorch forward (eval mode)."""
    D = x.shape[-1]
    scores = jnp.einsum("bld,bkd->blk", x, target) / math.sqrt(D)
    attn = jax.nn.softmax(scores, axis=-1)
    ctx = jnp.einsum("blk,bkd->bld", attn, target)
    att_pool = ctx.mean(axis=1)                                   # (B, D)
    # x_proj(x.mT).squeeze(-1) : Linear(seq_len,1)+ReLU over the seq axis
    xp = jax.nn.relu(jnp.einsum("bld,l->bd", x, w_xp[0]) + b_xp[0, 0])
    new_x = xp + att_pool
    y = jax.nn.relu(new_x @ w_enc.T + b_enc[0])
    return new_x + y, attn


if __name__ == "__main__":
    B, L, D = 2, 8, 32   # batch, seq_len, d_model
    Lt = 8               # target length

    key = jax.random.PRNGKey(0)
    kx, kt, k1, k2, k3, k4 = jax.random.split(key, 6)

    x = jax.random.normal(kx, (B, L, D), dtype=jnp.float32)
    target = jax.random.normal(kt, (B, Lt, D), dtype=jnp.float32)

    # Deterministic parameter init (shapes follow nn.Linear(seq_len,1) and
    # nn.Linear(d_model,d_model)).
    w_xp = jax.random.normal(k1, (1, L), dtype=jnp.float32) * (1.0 / math.sqrt(L))
    b_xp = jax.random.normal(k2, (1, 1), dtype=jnp.float32) * 0.1
    w_enc = jax.random.normal(k3, (D, D), dtype=jnp.float32) * (1.0 / math.sqrt(D))
    b_enc = jax.random.normal(k4, (1, D), dtype=jnp.float32) * 0.1

    out, attn = encoder_layer(x, target, w_xp, b_xp, w_enc, b_enc)
    out = jax.block_until_ready(out)
    attn = jax.block_until_ready(attn)

    out_ref, attn_ref = encoder_layer_ref(x, target, w_xp, b_xp, w_enc, b_enc)
    np.testing.assert_allclose(np.asarray(out), np.asarray(out_ref),
                               rtol=1e-5, atol=1e-5)
    np.testing.assert_allclose(np.asarray(attn), np.asarray(attn_ref),
                               rtol=1e-5, atol=1e-5)

    print("KERNEL_OK")
</pallas_src>

<mosaic_0001>
module attributes {stable_mosaic.version = 11 : i64} {
  func.func @encoder_layer_kernel(%arg0: i32, %arg1: memref<2x8x32xf32, #tpu.memory_space<vmem>>, %arg2: memref<2x8x32xf32, #tpu.memory_space<vmem>>, %arg3: memref<8x1xf32, #tpu.memory_space<vmem>>, %arg4: memref<1x1xf32, #tpu.memory_space<vmem>>, %arg5: memref<32x32xf32, #tpu.memory_space<vmem>>, %arg6: memref<1x32xf32, #tpu.memory_space<vmem>>, %arg7: memref<2x32xf32, #tpu.memory_space<vmem>>, %arg8: memref<2x8x8xf32, #tpu.memory_space<vmem>>) attributes {dimension_semantics = [#tpu.dimension_semantics<arbitrary>], iteration_bounds = array<i64: 1>, scalar_prefetch = 0 : i64, scratch_operands = 0 : i64, tpu.core_type = #tpu.core_type<tc>, window_params = [{pipeline_mode = #tpu.pipeline_mode<synchronous>, transform_indices = @transform_0, window_bounds = array<i64: 2, 8, 32>}, {pipeline_mode = #tpu.pipeline_mode<synchronous>, transform_indices = @transform_1, window_bounds = array<i64: 2, 8, 32>}, {pipeline_mode = #tpu.pipeline_mode<synchronous>, transform_indices = @transform_2, window_bounds = array<i64: 8, 1>}, {pipeline_mode = #tpu.pipeline_mode<synchronous>, transform_indices = @transform_3, window_bounds = array<i64: 1, 1>}, {pipeline_mode = #tpu.pipeline_mode<synchronous>, transform_indices = @transform_4, window_bounds = array<i64: 32, 32>}, {pipeline_mode = #tpu.pipeline_mode<synchronous>, transform_indices = @transform_5, window_bounds = array<i64: 1, 32>}, {pipeline_mode = #tpu.pipeline_mode<synchronous>, transform_indices = @transform_6, window_bounds = array<i64: 2, 32>}, {pipeline_mode = #tpu.pipeline_mode<synchronous>, transform_indices = @transform_7, window_bounds = array<i64: 2, 8, 8>}]} {
    %c0 = arith.constant 0 : index
    %c0_0 = arith.constant 0 : index
    %c0_1 = arith.constant 0 : index
    %0 = vector.load %arg1[%c0, %c0_0, %c0_1] : memref<2x8x32xf32, #tpu.memory_space<vmem>>, vector<2x8x32xf32>
    %c0_2 = arith.constant 0 : index
    %c0_3 = arith.constant 0 : index
    %c0_4 = arith.constant 0 : index
    %1 = vector.load %arg2[%c0_2, %c0_3, %c0_4] : memref<2x8x32xf32, #tpu.memory_space<vmem>>, vector<2x8x32xf32>
    "tpu.trace_start"() <{level = 10 : i32, message = "bld,bkd->blk"}> : () -> ()
    %cst = arith.constant dense<0.000000e+00> : vector<2x8x8xf32>
    %2 = tpu.matmul %0, %1, %cst {dimension_numbers = #tpu.dot_dimension_numbers<[2], [2], [1], [1], [0, 0, 0, 1, 1, 1], [0], [0]>} : vector<2x8x32xf32>, vector<2x8x32xf32>, vector<2x8x8xf32> -> vector<2x8x8xf32>
    "tpu.trace_stop"() : () -> ()
    %cst_5 = arith.constant 0.176776692 : f32
    %3 = vector.broadcast %cst_5 : f32 to vector<2x8x8xf32>
    %4 = arith.mulf %2, %3 : vector<2x8x8xf32>
    %cst_6 = arith.constant dense<0xFF800000> : vector<2x8xf32>
    %5 = vector.multi_reduction <maximumf>, %4, %cst_6 [2] : vector<2x8x8xf32> to vector<2x8xf32>
    %6 = vector.shape_cast %5 : vector<2x8xf32> to vector<2x8x1xf32>
    %7 = vector.broadcast %6 : vector<2x8x1xf32> to vector<2x8x8xf32>
    %8 = arith.subf %4, %7 : vector<2x8x8xf32>
    %9 = math.exp %8 : vector<2x8x8xf32>
    %cst_7 = arith.constant dense<0.000000e+00> : vector<2x8xf32>
    %10 = vector.multi_reduction <add>, %9, %cst_7 [2] : vector<2x8x8xf32> to vector<2x8xf32>
    %11 = vector.shape_cast %10 : vector<2x8xf32> to vector<2x8x1xf32>
    %12 = tpu.reciprocal %11 : vector<2x8x1xf32> -> vector<2x8x1xf32>
    %13 = vector.broadcast %12 : vector<2x8x1xf32> to vector<2x8x8xf32>
    %14 = arith.mulf %9, %13 : vector<2x8x8xf32>
    "tpu.trace_start"() <{level = 10 : i32, message = "blk,bkd->bld"}> : () -> ()
    %cst_8 = arith.constant dense<0.000000e+00> : vector<2x8x32xf32>
    %15 = tpu.matmul %14, %1, %cst_8 {dimension_numbers = #tpu.dot_dimension_numbers<[2], [1], [1], [2], [0, 0, 0, 1, 1, 2], [0], [0]>} : vector<2x8x8xf32>, vector<2x8x32xf32>, vector<2x8x32xf32> -> vector<2x8x32xf32>
    "tpu.trace_stop"() : () -> ()
    %cst_9 = arith.constant dense<0.000000e+00> : vector<2x32xf32>
    %16 = vector.multi_reduction <add>, %15, %cst_9 [1] : vector<2x8x32xf32> to vector<2x32xf32>
    %cst_10 = arith.constant 1.250000e-01 : f32
    %17 = vector.broadcast %cst_10 : f32 to vector<2x32xf32>
    %18 = arith.mulf %16, %17 : vector<2x32xf32>
    %c0_11 = arith.constant 0 : index
    %c0_12 = arith.constant 0 : index
    %19 = vector.load %arg3[%c0_11, %c0_12] : memref<8x1xf32, #tpu.memory_space<vmem>>, vector<8x1xf32>
    %20 = vector.shape_cast %19 : vector<8x1xf32> to vector<1x8x1xf32>
    %21 = vector.broadcast %20 : vector<1x8x1xf32> to vector<2x8x32xf32>
    %22 = arith.mulf %0, %21 : vector<2x8x32xf32>
    %cst_13 = arith.constant dense<0.000000e+00> : vector<2x32xf32>
    %23 = vector.multi_reduction <add>, %22, %cst_13 [1] : vector<2x8x32xf32> to vector<2x32xf32>
    %c0_14 = arith.constant 0 : index
    %c0_15 = arith.constant 0 : index
    %24 = vector.load %arg4[%c0_14, %c0_15] : memref<1x1xf32, #tpu.memory_space<vmem>>, vector<1x1xf32>
    %25 = vector.broadcast %24 : vector<1x1xf32> to vector<2x32xf32>
    %26 = arith.addf %23, %25 : vector<2x32xf32>
    %cst_16 = arith.constant 0.000000e+00 : f32
    %27 = vector.broadcast %cst_16 : f32 to vector<2x32xf32>
    %28 = arith.maximumf %26, %27 : vector<2x32xf32>
    %29 = arith.addf %28, %18 : vector<2x32xf32>
    %c0_17 = arith.constant 0 : index
    %c0_18 = arith.constant 0 : index
    %30 = vector.load %arg5[%c0_17, %c0_18] : memref<32x32xf32, #tpu.memory_space<vmem>>, vector<32x32xf32>
    %cst_19 = arith.constant dense<0.000000e+00> : vector<2x32xf32>
    %31 = tpu.matmul %29, %30, %cst_19 {dimension_numbers = #tpu.dot_dimension_numbers<[1], [0], [0], [1], [0, 0, 1, 1], [], []>} : vector<2x32xf32>, vector<32x32xf32>, vector<2x32xf32> -> vector<2x32xf32>
    %c0_20 = arith.constant 0 : index
    %c0_21 = arith.constant 0 : index
    %32 = vector.load %arg6[%c0_20, %c0_21] : memref<1x32xf32, #tpu.memory_space<vmem>>, vector<1x32xf32>
    %33 = vector.broadcast %32 : vector<1x32xf32> to vector<2x32xf32>
    %34 = arith.addf %31, %33 : vector<2x32xf32>
    %cst_22 = arith.constant 0.000000e+00 : f32
    %35 = vector.broadcast %cst_22 : f32 to vector<2x32xf32>
    %36 = arith.maximumf %34, %35 : vector<2x32xf32>
    %37 = arith.addf %29, %36 : vector<2x32xf32>
    %c0_23 = arith.constant 0 : index
    %c0_24 = arith.constant 0 : index
    %38 = vector.load %arg7[%c0_23, %c0_24] : memref<2x32xf32, #tpu.memory_space<vmem>>, vector<2x32xf32>
    tpu.vector_store %arg7[%c0_23, %c0_24], %37 {strides = array<i32>} : memref<2x32xf32, #tpu.memory_space<vmem>>, vector<2x32xf32>,
    %c0_25 = arith.constant 0 : index
    %c0_26 = arith.constant 0 : index
    %c0_27 = arith.constant 0 : index
    %39 = vector.load %arg8[%c0_25, %c0_26, %c0_27] : memref<2x8x8xf32, #tpu.memory_space<vmem>>, vector<2x8x8xf32>
    tpu.vector_store %arg8[%c0_25, %c0_26, %c0_27], %14 {strides = array<i32>} : memref<2x8x8xf32, #tpu.memory_space<vmem>>, vector<2x8x8xf32>,
    return
  }
  func.func @transform_0(%arg0: i32) -> (i32, i32, i32) {
    %c0_i32 = arith.constant 0 : i32
    %c0_i32_0 = arith.constant 0 : i32
    %c0_i32_1 = arith.constant 0 : i32
    %c0_i32_2 = arith.constant 0 : i32
    return %c0_i32, %c0_i32_0, %c0_i32_1 : i32, i32, i32
  }
  func.func @transform_1(%arg0: i32) -> (i32, i32, i32) {
    %c0_i32 = arith.constant 0 : i32
    %c0_i32_0 = arith.constant 0 : i32
    %c0_i32_1 = arith.constant 0 : i32
    %c0_i32_2 = arith.constant 0 : i32
    return %c0_i32, %c0_i32_0, %c0_i32_1 : i32, i32, i32
  }
  func.func @transform_2(%arg0: i32) -> (i32, i32) {
    %c0_i32 = arith.constant 0 : i32
    %c0_i32_0 = arith.constant 0 : i32
    %c0_i32_1 = arith.constant 0 : i32
    return %c0_i32, %c0_i32_0 : i32, i32
  }
  func.func @transform_3(%arg0: i32) -> (i32, i32) {
    %c0_i32 = arith.constant 0 : i32
    %c0_i32_0 = arith.constant 0 : i32
    %c0_i32_1 = arith.constant 0 : i32
    return %c0_i32, %c0_i32_0 : i32, i32
  }
  func.func @transform_4(%arg0: i32) -> (i32, i32) {
    %c0_i32 = arith.constant 0 : i32
    %c0_i32_0 = arith.constant 0 : i32
    %c0_i32_1 = arith.constant 0 : i32
    return %c0_i32, %c0_i32_0 : i32, i32
  }
  func.func @transform_5(%arg0: i32) -> (i32, i32) {
    %c0_i32 = arith.constant 0 : i32
    %c0_i32_0 = arith.constant 0 : i32
    %c0_i32_1 = arith.constant 0 : i32
    return %c0_i32, %c0_i32_0 : i32, i32
  }
  func.func @transform_6(%arg0: i32) -> (i32, i32) {
    %c0_i32 = arith.constant 0 : i32
    %c0_i32_0 = arith.constant 0 : i32
    %c0_i32_1 = arith.constant 0 : i32
    return %c0_i32, %c0_i32_0 : i32, i32
  }
  func.func @transform_7(%arg0: i32) -> (i32, i32, i32) {
    %c0_i32 = arith.constant 0 : i32
    %c0_i32_0 = arith.constant 0 : i32
    %c0_i32_1 = arith.constant 0 : i32
    %c0_i32_2 = arith.constant 0 : i32
    return %c0_i32, %c0_i32_0, %c0_i32_1 : i32, i32, i32
  }
}

</mosaic_0001>

<llo_original>
// kernel: tpu_custom_call.1
$region0: #{tpu_custom_call.1}
  #allocation0 [shape = 'u32[]', space=smem, size = 0x4, offset = 0x4, fixed_abs, tag = 'smem constant byte address 0x4 - core index']
  #allocation1 [shape = 'u32[144,128]{1,0:T(1,128)}', space=vmem, size = 0x12000, scoped, tag = 'internal scratch']
  #allocation2 [shape = 'f32[1,1]{1,0:T(1,128)S(1)}', space=vmem, size = 0x200, scoped, tag = 'scoped memory for tpu_custom_call.1']
  %s0 = inlined_call_operand.hbm [shape: f32[2,8,32], index: 0, kind: input, shape index: {}]
  %s1 = inlined_call_operand.vmem [shape: f32[2,8,32], index: 1, kind: input, shape index: {}]
  %s2 = inlined_call_operand.vmem [shape: f32[8,1], index: 2, kind: input, shape index: {}]
  %s3 = inlined_call_operand.<no memory space> [shape: f32[1,1], index: 3, kind: input, shape index: {}]
  %s4 = inlined_call_operand.hbm [shape: f32[32,32], index: 4, kind: input, shape index: {}]
  %s5 = inlined_call_operand.vmem [shape: f32[1,32], index: 5, kind: input, shape index: {}]
  %s6 = inlined_call_operand.hbm [shape: f32[2,32], index: 6, kind: output, shape index: {0}]
  %s7 = inlined_call_operand.hbm [shape: f32[2,8,8], index: 7, kind: output, shape index: {1}]
  %8 = xla_tuple %s6, %s7
  %s9 = sld [smem:[#allocation0]]
  $region50: #{tpu_custom_call.1} parent=0
    _
  %s11 = ssub.s32 1, %s9
  %s12 = scalar_select 0, %s11, %s9
  %v13 = vstv %s3
  %14 = vst [vmem:[#allocation2] sm:$0x1] %v13
  $region1: #{tpu_custom_call.1} parent=0
    #allocation3 [shape = 'u8[8192]{0}', space=vmem, size = 0x2000, scoped, tag = 'input window, operand 0, single buffered']
    #allocation4 [shape = 's32[1]{0}', space=sflag, size = 0x4, scoped, tag = 'scoped memory for tpu_custom_call.1']
    #allocation5 [shape = 's32[1]{0}', space=sflag, size = 0x4, scoped, tag = 'scoped memory for tpu_custom_call.1']
    #allocation6 [shape = 'u8[16384]{0}', space=vmem, size = 0x4000, scoped, tag = 'input window, operand 4, single buffered']
    #allocation7 [shape = 's32[1]{0}', space=sflag, size = 0x4, scoped, tag = 'scoped memory for tpu_custom_call.1']
    #allocation8 [shape = 'u8[1024]{0}', space=vmem, size = 0x400, scoped, tag = 'output window, operand 0, single buffered']
    #allocation9 [shape = 'u8[8192]{0}', space=vmem, size = 0x2000, scoped, tag = 'output window, operand 1, single buffered']
    #allocation10 [shape = 's32[1]{0}', space=sflag, size = 0x4, scoped, tag = 'scoped memory for tpu_custom_call.1']
    %15 = vsyncpa [#allocation4], 0
    %16 = vsyncpa [#allocation7], 0
    %17 = vsyncpa [#allocation5], 0
    %18 = vsyncpa [#allocation10], 0
    // Predicated region
    $region2: #{tpu_custom_call.1} parent=1 // pred_check
      _
    $region3: #{tpu_custom_call.1} parent=1 // pred_check_branch
      %20 = sbr.rel (0) target = $region5
    $region4: #{tpu_custom_call.1} parent=1 // pred_region
      %s22 = ssub.s32 256, 256
      %23 = vsyncadd [#allocation4], %s22
      %s24 = sshll.u32 [#allocation3], 4
      %s25 = int_to_ptr.vmem [resolvable:$true] %s24
      %30 = dma.hbm_to_vmem [thread:$0]  %s0, 256, %s25, [#allocation4], 128, 128, 8
    $region5: #{tpu_custom_call.1} parent=1 // pred_fallthru
      _
    // Predicated region
    $region6: #{tpu_custom_call.1} parent=1 // pred_check
      _
    $region7: #{tpu_custom_call.1} parent=1 // pred_check_branch
      %32 = sbr.rel (0) target = $region9
    $region8: #{tpu_custom_call.1} parent=1 // pred_region
      _
    $region9: #{tpu_custom_call.1} parent=1 // pred_fallthru
      _
    // Predicated region
    $region10: #{tpu_custom_call.1} parent=1 // pred_check
      _
    $region11: #{tpu_custom_call.1} parent=1 // pred_check_branch
      %34 = sbr.rel (0) target = $region13
    $region12: #{tpu_custom_call.1} parent=1 // pred_region
      _
    $region13: #{tpu_custom_call.1} parent=1 // pred_fallthru
      _
    // Predicated region
    $region14: #{tpu_custom_call.1} parent=1 // pred_check
      _
    $region15: #{tpu_custom_call.1} parent=1 // pred_check_branch
      %36 = sbr.rel (0) target = $region17
    $region16: #{tpu_custom_call.1} parent=1 // pred_region
      _
    $region17: #{tpu_custom_call.1} parent=1 // pred_fallthru
      _
    // Predicated region
    $region18: #{tpu_custom_call.1} parent=1 // pred_check
      _
    $region19: #{tpu_custom_call.1} parent=1 // pred_check_branch
      %38 = sbr.rel (0) target = $region21
    $region20: #{tpu_custom_call.1} parent=1 // pred_region
      %s40 = ssub.s32 512, 512
      %41 = vsyncadd [#allocation7], %s40
      %s42 = sshll.u32 [#allocation6], 4
      %s43 = int_to_ptr.vmem [resolvable:$true] %s42
      %48 = dma.hbm_to_vmem [thread:$0]  %s4, 512, %s43, [#allocation7], 128, 128, 8
    $region21: #{tpu_custom_call.1} parent=1 // pred_fallthru
      _
    // Predicated region
    $region22: #{tpu_custom_call.1} parent=1 // pred_check
      _
    $region23: #{tpu_custom_call.1} parent=1 // pred_check_branch
      %50 = sbr.rel (0) target = $region25
    $region24: #{tpu_custom_call.1} parent=1 // pred_region
      _
    $region25: #{tpu_custom_call.1} parent=1 // pred_fallthru
      _
    // Predicated region
    $region26: #{tpu_custom_call.1} parent=1 // pred_check
      _
    $region27: #{tpu_custom_call.1} parent=1 // pred_check_branch
      %52 = sbr.rel (0) target = $region29
    $region28: #{tpu_custom_call.1} parent=1 // pred_region
      %53 = dma.done [#allocation4], 256
    $region29: #{tpu_custom_call.1} parent=1 // pred_fallthru
      _
    // Predicated region
    $region30: #{tpu_custom_call.1} parent=1 // pred_check
      _
    $region31: #{tpu_custom_call.1} parent=1 // pred_check_branch
      %55 = sbr.rel (0) target = $region33
    $region32: #{tpu_custom_call.1} parent=1 // pred_region
      %56 = dma.done [#allocation7], 512
    $region33: #{tpu_custom_call.1} parent=1 // pred_fallthru
      _
    %v57 = vld [vmem:[#allocation3] sm:$0xff]
    %v58 = vld [vmem:[#allocation3 + $0x8] sm:$0xff]
    %v59 = vld [vmem:[%s1] sm:$0xff]
    %v60 = vld [vmem:[%s1 + $0x8] sm:$0xff]
    %vm61 = vcmask 261120
    %v63 = vsel %vm61, %v57, 0
    %v66 = vsel %vm61, %v59, 0
    %68 = vmatprep.subr.mxu0 0.0
    %69 = vmatpush1.xpose.msra.mxu0 %v66
    %70 = vmatprep.subr.mxu0 0.0
    %71 = vmatpush1.xpose.msra.mxu0 0.0
    %72 = vmatprep.subr.mxu0 0.0
    %73 = vmatpush1.xpose.msra.mxu0 0.0
    %74 = vmatprep.subr.mxu0 0.0
    %75 = vmatpush1.xpose.msra.mxu0 0.0
    %76 = vmatprep.subr.mxu0 0.0
    %77 = vmatpush1.xpose.msra.mxu0 0.0
    %78 = vmatprep.subr.mxu0 0.0
    %79 = vmatpush1.xpose.msra.mxu0 0.0
    %80 = vmatprep.subr.mxu0 0.0
    %81 = vmatpush1.xpose.msra.mxu0 0.0
    %82 = vmatprep.subr.mxu0 0.0
    %83 = vmatpush1.xpose.msra.mxu0 0.0
    %84 = vmatprep.subr.mxu0 0.0
    %85 = vmatpush1.xpose.msra.mxu0 0.0
    %86 = vmatprep.subr.mxu0 0.0
    %87 = vmatpush1.xpose.msra.mxu0 0.0
    %88 = vmatprep.subr.mxu0 0.0
    %89 = vmatpush1.xpose.msra.mxu0 0.0
    %90 = vmatprep.subr.mxu0 0.0
    %91 = vmatpush1.xpose.msra.mxu0 0.0
    %92 = vmatprep.subr.mxu0 0.0
    %93 = vmatpush1.xpose.msra.mxu0 0.0
    %94 = vmatprep.subr.mxu0 0.0
    %95 = vmatpush1.xpose.msra.mxu0 0.0
    %96 = vmatprep.subr.mxu0 0.0
    %97 = vmatpush1.xpose.msra.mxu0 0.0
    %98 = vmatprep.subr.mxu0 0.0
    %99 = vmatpush1.xpose.msra.mxu0 0.0
    %100 = vmatprep.subr.mxu0 0.0
    %101 = vmatpush1.xpose.msra.mxu0 0.0
    %102 = vmatprep.subr.mxu0 0.0
    %103 = vmatpush1.xpose.msra.mxu0 0.0
    %104 = vmatprep.subr.mxu0 0.0
    %105 = vmatpush1.xpose.msra.mxu0 0.0
    %106 = vmatprep.subr.mxu0 0.0
    %107 = vmatpush1.xpose.msra.mxu0 0.0
    %108 = vmatprep.subr.mxu0 0.0
    %109 = vmatpush1.xpose.msra.mxu0 0.0
    %110 = vmatprep.subr.mxu0 0.0
    %111 = vmatpush1.xpose.msra.mxu0 0.0
    %112 = vmatprep.subr.mxu0 0.0
    %113 = vmatpush1.xpose.msra.mxu0 0.0
    %114 = vmatprep.subr.mxu0 0.0
    %115 = vmatpush1.xpose.msra.mxu0 0.0
    %116 = vmatprep.subr.mxu0 0.0
    %117 = vmatpush1.xpose.msra.mxu0 0.0
    %118 = vmatprep.subr.mxu0 0.0
    %119 = vmatpush1.xpose.msra.mxu0 0.0
    %120 = vmatprep.subr.mxu0 0.0
    %121 = vmatpush1.xpose.msra.mxu0 0.0
    %122 = vmatprep.subr.mxu0 0.0
    %123 = vmatpush1.xpose.msra.mxu0 0.0
    %124 = vmatprep.subr.mxu0 0.0
    %125 = vmatpush1.xpose.msra.mxu0 0.0
    %126 = vmatprep.subr.mxu0 0.0
    %127 = vmatpush1.xpose.msra.mxu0 0.0
    %128 = vmatprep.subr.mxu0 0.0
    %129 = vmatpush1.xpose.msra.mxu0 0.0
    %130 = vmatprep.subr.mxu0 0.0
    %131 = vmatpush1.xpose.msra.mxu0 0.0
    %132 = vmatprep.mubr.f32.mxu0 0.0
    %133 = vmatmul.mubr.f32.gmra.mrb[0].mxu0 %v63
    %v134 = vpop.f32.mrb[0].mxu0
    %v135 = vadd.f32 0.0, %v134
    %v136 = vpop.f32.mrb[0].mxu0
    %137 = vdwg.mxu0
    %v139 = vsel %vm61, %v58, 0
    %v142 = vsel %vm61, %v60, 0
    %144 = vmatprep.subr.mxu0 0.0
    %145 = vmatpush1.xpose.msra.mxu0 %v142
    %146 = vmatprep.subr.mxu0 0.0
    %147 = vmatpush1.xpose.msra.mxu0 0.0
    %148 = vmatprep.subr.mxu0 0.0
    %149 = vmatpush1.xpose.msra.mxu0 0.0
    %150 = vmatprep.subr.mxu0 0.0
    %151 = vmatpush1.xpose.msra.mxu0 0.0
    %152 = vmatprep.subr.mxu0 0.0
    %153 = vmatpush1.xpose.msra.mxu0 0.0
    %154 = vmatprep.subr.mxu0 0.0
    %155 = vmatpush1.xpose.msra.mxu0 0.0
    %156 = vmatprep.subr.mxu0 0.0
    %157 = vmatpush1.xpose.msra.mxu0 0.0
    %158 = vmatprep.subr.mxu0 0.0
    %159 = vmatpush1.xpose.msra.mxu0 0.0
    %160 = vmatprep.subr.mxu0 0.0
    %161 = vmatpush1.xpose.msra.mxu0 0.0
    %162 = vmatprep.subr.mxu0 0.0
    %163 = vmatpush1.xpose.msra.mxu0 0.0
    %164 = vmatprep.subr.mxu0 0.0
    %165 = vmatpush1.xpose.msra.mxu0 0.0
    %166 = vmatprep.subr.mxu0 0.0
    %167 = vmatpush1.xpose.msra.mxu0 0.0
    %168 = vmatprep.subr.mxu0 0.0
    %169 = vmatpush1.xpose.msra.mxu0 0.0
    %170 = vmatprep.subr.mxu0 0.0
    %171 = vmatpush1.xpose.msra.mxu0 0.0
    %172 = vmatprep.subr.mxu0 0.0
    %173 = vmatpush1.xpose.msra.mxu0 0.0
    %174 = vmatprep.subr.mxu0 0.0
    %175 = vmatpush1.xpose.msra.mxu0 0.0
    %176 = vmatprep.subr.mxu0 0.0
    %177 = vmatpush1.xpose.msra.mxu0 0.0
    %178 = vmatprep.subr.mxu0 0.0
    %179 = vmatpush1.xpose.msra.mxu0 0.0
    %180 = vmatprep.subr.mxu0 0.0
    %181 = vmatpush1.xpose.msra.mxu0 0.0
    %182 = vmatprep.subr.mxu0 0.0
    %183 = vmatpush1.xpose.msra.mxu0 0.0
    %184 = vmatprep.subr.mxu0 0.0
    %185 = vmatpush1.xpose.msra.mxu0 0.0
    %186 = vmatprep.subr.mxu0 0.0
    %187 = vmatpush1.xpose.msra.mxu0 0.0
    %188 = vmatprep.subr.mxu0 0.0
    %189 = vmatpush1.xpose.msra.mxu0 0.0
    %190 = vmatprep.subr.mxu0 0.0
    %191 = vmatpush1.xpose.msra.mxu0 0.0
    %192 = vmatprep.subr.mxu0 0.0
    %193 = vmatpush1.xpose.msra.mxu0 0.0
    %194 = vmatprep.subr.mxu0 0.0
    %195 = vmatpush1.xpose.msra.mxu0 0.0
    %196 = vmatprep.subr.mxu0 0.0
    %197 = vmatpush1.xpose.msra.mxu0 0.0
    %198 = vmatprep.subr.mxu0 0.0
    %199 = vmatpush1.xpose.msra.mxu0 0.0
    %200 = vmatprep.subr.mxu0 0.0
    %201 = vmatpush1.xpose.msra.mxu0 0.0
    %202 = vmatprep.subr.mxu0 0.0
    %203 = vmatpush1.xpose.msra.mxu0 0.0
    %204 = vmatprep.subr.mxu0 0.0
    %205 = vmatpush1.xpose.msra.mxu0 0.0
    %206 = vmatprep.subr.mxu0 0.0
    %207 = vmatpush1.xpose.msra.mxu0 0.0
    %208 = vmatprep.mubr.f32.mxu0 0.0
    %209 = vmatmul.mubr.f32.gmra.mrb[0].mxu0 %v139
    %v210 = vpop.f32.mrb[0].mxu0
    %v211 = vadd.f32 0.0, %v210
    %v212 = vpop.f32.mrb[0].mxu0
    %213 = vdwg.mxu0
    %v214 = vmul.f32 %v135, 0.17677669
    %v215 = vmul.f32 %v211, 0.17677669
    %vm216 = vcmask 64512
    %v217 = vsel %vm216, %v214, -inf
    %218 = vmax.xlane.f32.xlu0 %v217
    %v219 = vpop.xlane.xlu0 %218
    %v220 = vsel %vm216, %v215, -inf
    %221 = vmax.xlane.f32.xlu0 %v220
    %v222 = vpop.xlane.xlu0 %221
    %v223 = vsub.f32 %v214, %v219
    %v224 = vsub.f32 %v215, %v222
    %v225 = vmul.f32 %v223, 1.442695
    %v226 = vpow.pop %v225
    %v227 = vmul.f32 %v224, 1.442695
    %v228 = vpow.pop %v227
    %v229 = vsel %vm216, %v226, 0.0
    %230 = vadd.xlane.f32.xlu0 %v229
    %v231 = vpop.xlane.xlu0 %230
    %v232 = vsel %vm216, %v228, 0.0
    %233 = vadd.xlane.f32.xlu0 %v232
    %v234 = vpop.xlane.xlu0 %233
    %v235 = vrcp.pop %v231
    %v236 = vrcp.pop %v234
    %v237 = vmul.f32 %v226, %v235
    %v238 = vmul.f32 %v228, %v236
    %v240 = vsel %vm216, %v237, 0
    %242 = vmatprep.subr.mxu0 0.0
    %243 = vmatpush1.msra.mxu0 %v59
    %244 = vmatprep.subr.mxu0 0.0
    %245 = vmatpush1.msra.mxu0 0.0
    %246 = vmatprep.subr.mxu0 0.0
    %247 = vmatpush1.msra.mxu0 0.0
    %248 = vmatprep.subr.mxu0 0.0
    %249 = vmatpush1.msra.mxu0 0.0
    %250 = vmatprep.subr.mxu0 0.0
    %251 = vmatpush1.msra.mxu0 0.0
    %252 = vmatprep.subr.mxu0 0.0
    %253 = vmatpush1.msra.mxu0 0.0
    %254 = vmatprep.subr.mxu0 0.0
    %255 = vmatpush1.msra.mxu0 0.0
    %256 = vmatprep.subr.mxu0 0.0
    %257 = vmatpush1.msra.mxu0 0.0
    %258 = vmatprep.subr.mxu0 0.0
    %259 = vmatpush1.msra.mxu0 0.0
    %260 = vmatprep.subr.mxu0 0.0
    %261 = vmatpush1.msra.mxu0 0.0
    %262 = vmatprep.subr.mxu0 0.0
    %263 = vmatpush1.msra.mxu0 0.0
    %264 = vmatprep.subr.mxu0 0.0
    %265 = vmatpush1.msra.mxu0 0.0
    %266 = vmatprep.subr.mxu0 0.0
    %267 = vmatpush1.msra.mxu0 0.0
    %268 = vmatprep.subr.mxu0 0.0
    %269 = vmatpush1.msra.mxu0 0.0
    %270 = vmatprep.subr.mxu0 0.0
    %271 = vmatpush1.msra.mxu0 0.0
    %272 = vmatprep.subr.mxu0 0.0
    %273 = vmatpush1.msra.mxu0 0.0
    %274 = vmatprep.subr.mxu0 0.0
    %275 = vmatpush1.msra.mxu0 0.0
    %276 = vmatprep.subr.mxu0 0.0
    %277 = vmatpush1.msra.mxu0 0.0
    %278 = vmatprep.subr.mxu0 0.0
    %279 = vmatpush1.msra.mxu0 0.0
    %280 = vmatprep.subr.mxu0 0.0
    %281 = vmatpush1.msra.mxu0 0.0
    %282 = vmatprep.subr.mxu0 0.0
    %283 = vmatpush1.msra.mxu0 0.0
    %284 = vmatprep.subr.mxu0 0.0
    %285 = vmatpush1.msra.mxu0 0.0
    %286 = vmatprep.subr.mxu0 0.0
    %287 = vmatpush1.msra.mxu0 0.0
    %288 = vmatprep.subr.mxu0 0.0
    %289 = vmatpush1.msra.mxu0 0.0
    %290 = vmatprep.subr.mxu0 0.0
    %291 = vmatpush1.msra.mxu0 0.0
    %292 = vmatprep.subr.mxu0 0.0
    %293 = vmatpush1.msra.mxu0 0.0
    %294 = vmatprep.subr.mxu0 0.0
    %295 = vmatpush1.msra.mxu0 0.0
    %296 = vmatprep.subr.mxu0 0.0
    %297 = vmatpush1.msra.mxu0 0.0
    %298 = vmatprep.subr.mxu0 0.0
    %299 = vmatpush1.msra.mxu0 0.0
    %300 = vmatprep.subr.mxu0 0.0
    %301 = vmatpush1.msra.mxu0 0.0
    %302 = vmatprep.subr.mxu0 0.0
    %303 = vmatpush1.msra.mxu0 0.0
    %304 = vmatprep.subr.mxu0 0.0
    %305 = vmatpush1.msra.mxu0 0.0
    %306 = vmatprep.mubr.f32.mxu0 0.0
    %307 = vmatmul.mubr.f32.gmra.mrb[0].mxu0 %v240
    %v308 = vpop.f32.mrb[0].mxu0
    %v309 = vadd.f32 0.0, %v308
    %v310 = vpop.f32.mrb[0].mxu0
    %311 = vdwg.mxu0
    %v313 = vsel %vm216, %v238, 0
    %315 = vmatprep.subr.mxu0 0.0
    %316 = vmatpush1.msra.mxu0 %v60
    %317 = vmatprep.subr.mxu0 0.0
    %318 = vmatpush1.msra.mxu0 0.0
    %319 = vmatprep.subr.mxu0 0.0
    %320 = vmatpush1.msra.mxu0 0.0
    %321 = vmatprep.subr.mxu0 0.0
    %322 = vmatpush1.msra.mxu0 0.0
    %323 = vmatprep.subr.mxu0 0.0
    %324 = vmatpush1.msra.mxu0 0.0
    %325 = vmatprep.subr.mxu0 0.0
    %326 = vmatpush1.msra.mxu0 0.0
    %327 = vmatprep.subr.mxu0 0.0
    %328 = vmatpush1.msra.mxu0 0.0
    %329 = vmatprep.subr.mxu0 0.0
    %330 = vmatpush1.msra.mxu0 0.0
    %331 = vmatprep.subr.mxu0 0.0
    %332 = vmatpush1.msra.mxu0 0.0
    %333 = vmatprep.subr.mxu0 0.0
    %334 = vmatpush1.msra.mxu0 0.0
    %335 = vmatprep.subr.mxu0 0.0
    %336 = vmatpush1.msra.mxu0 0.0
    %337 = vmatprep.subr.mxu0 0.0
    %338 = vmatpush1.msra.mxu0 0.0
    %339 = vmatprep.subr.mxu0 0.0
    %340 = vmatpush1.msra.mxu0 0.0
    %341 = vmatprep.subr.mxu0 0.0
    %342 = vmatpush1.msra.mxu0 0.0
    %343 = vmatprep.subr.mxu0 0.0
    %344 = vmatpush1.msra.mxu0 0.0
    %345 = vmatprep.subr.mxu0 0.0
    %346 = vmatpush1.msra.mxu0 0.0
    %347 = vmatprep.subr.mxu0 0.0
    %348 = vmatpush1.msra.mxu0 0.0
    %349 = vmatprep.subr.mxu0 0.0
    %350 = vmatpush1.msra.mxu0 0.0
    %351 = vmatprep.subr.mxu0 0.0
    %352 = vmatpush1.msra.mxu0 0.0
    %353 = vmatprep.subr.mxu0 0.0
    %354 = vmatpush1.msra.mxu0 0.0
    %355 = vmatprep.subr.mxu0 0.0
    %356 = vmatpush1.msra.mxu0 0.0
    %357 = vmatprep.subr.mxu0 0.0
    %358 = vmatpush1.msra.mxu0 0.0
    %359 = vmatprep.subr.mxu0 0.0
    %360 = vmatpush1.msra.mxu0 0.0
    %361 = vmatprep.subr.mxu0 0.0
    %362 = vmatpush1.msra.mxu0 0.0
    %363 = vmatprep.subr.mxu0 0.0
    %364 = vmatpush1.msra.mxu0 0.0
    %365 = vmatprep.subr.mxu0 0.0
    %366 = vmatpush1.msra.mxu0 0.0
    %367 = vmatprep.subr.mxu0 0.0
    %368 = vmatpush1.msra.mxu0 0.0
    %369 = vmatprep.subr.mxu0 0.0
    %370 = vmatpush1.msra.mxu0 0.0
    %371 = vmatprep.subr.mxu0 0.0
    %372 = vmatpush1.msra.mxu0 0.0
    %373 = vmatprep.subr.mxu0 0.0
    %374 = vmatpush1.msra.mxu0 0.0
    %375 = vmatprep.subr.mxu0 0.0
    %376 = vmatpush1.msra.mxu0 0.0
    %377 = vmatprep.subr.mxu0 0.0
    %378 = vmatpush1.msra.mxu0 0.0
    %379 = vmatprep.mubr.f32.mxu0 0.0
    %380 = vmatmul.mubr.f32.gmra.mrb[0].mxu0 %v313
    %v381 = vpop.f32.mrb[0].mxu0
    %v382 = vadd.f32 0.0, %v381
    %v383 = vpop.f32.mrb[0].mxu0
    %384 = vdwg.mxu0
    %v385 = vsel %vm61, %v309, 0.0
    %v386 = vrot.slane %v385, 4
    %v387 = vadd.f32 %v385, %v386
    %v388 = vrot.slane %v387, 2
    %v389 = vadd.f32 %v387, %v388
    %v390 = vrot.slane %v389, 1
    %v391 = vadd.f32 %v389, %v390
    %v392 = vsel %vm61, %v382, 0.0
    %v393 = vrot.slane %v392, 4
    %v394 = vadd.f32 %v392, %v393
    %v395 = vrot.slane %v394, 2
    %v396 = vadd.f32 %v394, %v395
    %v397 = vrot.slane %v396, 1
    %v398 = vadd.f32 %v396, %v397
    %v399 = vmul.f32 %v391, 0.125
    %v400 = vmul.f32 %v398, 0.125
    %v401 = vld [vmem:[%s2] sm:$0xff]
    %403 = vset.pattern.permute.xlu0 0
    %404 = vperm.xlu0 %403, %v401
    %v405 = vpop.permute.xlu0 %404
    %v407 = vmul.f32 %v57, %v405
    %v408 = vmul.f32 %v58, %v405
    %v409 = vsel %vm61, %v407, 0.0
    %v410 = vrot.slane %v409, 4
    %v411 = vadd.f32 %v409, %v410
    %v412 = vrot.slane %v411, 2
    %v413 = vadd.f32 %v411, %v412
    %v414 = vrot.slane %v413, 1
    %v415 = vadd.f32 %v413, %v414
    %v416 = vsel %vm61, %v408, 0.0
    %v417 = vrot.slane %v416, 4
    %v418 = vadd.f32 %v416, %v417
    %v419 = vrot.slane %v418, 2
    %v420 = vadd.f32 %v418, %v419
    %v421 = vrot.slane %v420, 1
    %v422 = vadd.f32 %v420, %v421
    %v423 = vld [vmem:[#allocation2] sm:$0x1]
    %v425 = vlaneseq
    %v426 = vshrl.u32 %v425, 7
    %v427 = vsub.s32 0, %v426
    %v428 = vrot.slane %v423, %v427
    %429 = vset.pattern.permute.xlu0 0
    %430 = vperm.xlu0 %429, %v428
    %v431 = vpop.permute.xlu0 %430
    %v433 = vadd.f32 %v415, %v431
    %v434 = vadd.f32 %v422, %v431
    %v435 = vmax.f32 %v433, 0.0
    %v436 = vmax.f32 %v434, 0.0
    %v437 = vadd.f32 %v435, %v399
    %v438 = vadd.f32 %v436, %v400
    %v439 = vld [vmem:[#allocation6] sm:$0xff]
    %v440 = vld [vmem:[#allocation6 + $0x8] sm:$0xff]
    %v441 = vld [vmem:[#allocation6 + $0x10] sm:$0xff]
    %v442 = vld [vmem:[#allocation6 + $0x18] sm:$0xff]
    %v443 = vld [vmem:[%s5] sm:$0x1]
    %v445 = vlaneseq
    %v446 = vshrl.u32 %v445, 7
    %v447 = vsub.s32 0, %v446
    %v448 = vrot.slane %v443, %v447
    %vm452 = vcmask 1041409
    %v453 = vsel %vm452, %v438, %v437
    %v454 = vsel %vm61, %v453, 0
    %456 = vmatprep.subr.mxu0 0.0
    %457 = vmatpush1.msra.mxu0 %v439
    %458 = vmatprep.subr.mxu0 0.0
    %459 = vmatpush1.msra.mxu0 %v440
    %460 = vmatprep.subr.mxu0 0.0
    %461 = vmatpush1.msra.mxu0 %v441
    %462 = vmatprep.subr.mxu0 0.0
    %463 = vmatpush1.msra.mxu0 %v442
    %464 = vmatprep.subr.mxu0 0.0
    %465 = vmatpush1.msra.mxu0 0.0
    %466 = vmatprep.subr.mxu0 0.0
    %467 = vmatpush1.msra.mxu0 0.0
    %468 = vmatprep.subr.mxu0 0.0
    %469 = vmatpush1.msra.mxu0 0.0
    %470 = vmatprep.subr.mxu0 0.0
    %471 = vmatpush1.msra.mxu0 0.0
    %472 = vmatprep.subr.mxu0 0.0
    %473 = vmatpush1.msra.mxu0 0.0
    %474 = vmatprep.subr.mxu0 0.0
    %475 = vmatpush1.msra.mxu0 0.0
    %476 = vmatprep.subr.mxu0 0.0
    %477 = vmatpush1.msra.mxu0 0.0
    %478 = vmatprep.subr.mxu0 0.0
    %479 = vmatpush1.msra.mxu0 0.0
    %480 = vmatprep.subr.mxu0 0.0
    %481 = vmatpush1.msra.mxu0 0.0
    %482 = vmatprep.subr.mxu0 0.0
    %483 = vmatpush1.msra.mxu0 0.0
    %484 = vmatprep.subr.mxu0 0.0
    %485 = vmatpush1.msra.mxu0 0.0
    %486 = vmatprep.subr.mxu0 0.0
    %487 = vmatpush1.msra.mxu0 0.0
    %488 = vmatprep.subr.mxu0 0.0
    %489 = vmatpush1.msra.mxu0 0.0
    %490 = vmatprep.subr.mxu0 0.0
    %491 = vmatpush1.msra.mxu0 0.0
    %492 = vmatprep.subr.mxu0 0.0
    %493 = vmatpush1.msra.mxu0 0.0
    %494 = vmatprep.subr.mxu0 0.0
    %495 = vmatpush1.msra.mxu0 0.0
    %496 = vmatprep.subr.mxu0 0.0
    %497 = vmatpush1.msra.mxu0 0.0
    %498 = vmatprep.subr.mxu0 0.0
    %499 = vmatpush1.msra.mxu0 0.0
    %500 = vmatprep.subr.mxu0 0.0
    %501 = vmatpush1.msra.mxu0 0.0
    %502 = vmatprep.subr.mxu0 0.0
    %503 = vmatpush1.msra.mxu0 0.0
    %504 = vmatprep.subr.mxu0 0.0
    %505 = vmatpush1.msra.mxu0 0.0
    %506 = vmatprep.subr.mxu0 0.0
    %507 = vmatpush1.msra.mxu0 0.0
    %508 = vmatprep.subr.mxu0 0.0
    %509 = vmatpush1.msra.mxu0 0.0
    %510 = vmatprep.subr.mxu0 0.0
    %511 = vmatpush1.msra.mxu0 0.0
    %512 = vmatprep.subr.mxu0 0.0
    %513 = vmatpush1.msra.mxu0 0.0
    %514 = vmatprep.subr.mxu0 0.0
    %515 = vmatpush1.msra.mxu0 0.0
    %516 = vmatprep.subr.mxu0 0.0
    %517 = vmatpush1.msra.mxu0 0.0
    %518 = vmatprep.subr.mxu0 0.0
    %519 = vmatpush1.msra.mxu0 0.0
    %520 = vmatprep.mubr.f32.mxu0 0.0
    %521 = vmatmul.mubr.f32.gmra.mrb[0].mxu0 %v454
    %v522 = vpop.f32.mrb[0].mxu0
    %v523 = vadd.f32 %v448, %v522
    %v524 = vpop.f32.mrb[0].mxu0
    %525 = vdwg.mxu0
    %v526 = vmax.f32 %v523, 0.0
    %v528 = vrot.slane %v526, 1
    %v531 = vadd.f32 %v437, %v526
    %v532 = vadd.f32 %v438, %v528
    %v535 = vrot.slane %v532, 7
    %v536 = vsel %vm452, %v535, %v531
    %vm538 = vcmask 254976
    %539 = vst.msk [vmem:[#allocation8] sm:$0x3] %vm538, %v536
    %540 = vst.msk [vmem:[#allocation9] sm:$0xff] %vm216, %v237
    %541 = vst.msk [vmem:[#allocation9 + $0x8] sm:$0xff] %vm216, %v238
    // Predicated region
    $region34: #{tpu_custom_call.1} parent=1 // pred_check
      _
    $region35: #{tpu_custom_call.1} parent=1 // pred_check_branch
      %543 = sbr.rel (0) target = $region37
    $region36: #{tpu_custom_call.1} parent=1 // pred_region
      %s545 = ssub.s32 32, 32
      %546 = vsyncadd [#allocation5], %s545
      %s548 = sshll.u32 [#allocation8], 4
      %s549 = int_to_ptr.vmem [resolvable:$true] %s548
      %551 = dma.vmem_to_hbm [thread:$0]  %s549, 32, %s6, [#allocation5]
    $region37: #{tpu_custom_call.1} parent=1 // pred_fallthru
      _
    // Predicated region
    $region38: #{tpu_custom_call.1} parent=1 // pred_check
      _
    $region39: #{tpu_custom_call.1} parent=1 // pred_check_branch
      %553 = sbr.rel (0) target = $region41
    $region40: #{tpu_custom_call.1} parent=1 // pred_region
      %s555 = ssub.s32 256, 256
      %556 = vsyncadd [#allocation10], %s555
      %s557 = sshll.u32 [#allocation9], 4
      %s558 = int_to_ptr.vmem [resolvable:$true] %s557
      %563 = dma.vmem_to_hbm [thread:$0]  %s558, 256, %s7, [#allocation10], 128, 128, 8
    $region41: #{tpu_custom_call.1} parent=1 // pred_fallthru
      _
    // Predicated region
    $region42: #{tpu_custom_call.1} parent=1 // pred_check
      _
    $region43: #{tpu_custom_call.1} parent=1 // pred_check_branch
      %565 = sbr.rel (0) target = $region45
    $region44: #{tpu_custom_call.1} parent=1 // pred_region
      %566 = dma.done [#allocation5], 32
    $region45: #{tpu_custom_call.1} parent=1 // pred_fallthru
      _
    // Predicated region
    $region46: #{tpu_custom_call.1} parent=1 // pred_check
      _
    $region47: #{tpu_custom_call.1} parent=1 // pred_check_branch
      %568 = sbr.rel (0) target = $region49
    $region48: #{tpu_custom_call.1} parent=1 // pred_region
      %569 = dma.done [#allocation10], 256
    $region49: #{tpu_custom_call.1} parent=1 // pred_fallthru
      _
    %570 = vsyncpa [#allocation4], 1
    %571 = vsyncpa [#allocation7], 1
    %572 = vsyncpa [#allocation5], 1
    %573 = vsyncpa [#allocation10], 1

</llo_original>
